<compile_context>
chip_gen: v6e
topology: v6e:2x2x1
jax: 0.10.0
libtpu: 0.0.40
codegen_flags: <defaults>
</compile_context>

<pallas_src>
import functools

import numpy as np
import jax
import jax.numpy as jnp
from jax import lax
from jax.experimental import pallas as pl
from jax.experimental.pallas import tpu as pltpu


def _round_up(x, m):
    return (x + m - 1) // m * m


# ----------------------------- Pallas kernel --------------------------------
def _bottleneck_kernel(spatial_h, spatial_w,
                       x_ref, w1_ref, w2_ref, w3_ref, bias_ref, out_ref):
    """One grid step: channels on sublanes, pixels (all images) on lanes."""
    cin, lanes = x_ref.shape
    width = w1_ref.shape[0]
    cout = w3_ref.shape[0]
    log2_w = spatial_w.bit_length() - 1

    # Unpack the three biases from the single packed input (8-row aligned).
    o2 = _round_up(width, 8)
    o3 = o2 + _round_up(width, 8)
    b1 = bias_ref[0:width, :]
    b2 = bias_ref[o2:o2 + width, :]
    b3 = bias_ref[o3:o3 + cout, :]

    x = x_ref[...]                                            # (Cin, L) f32

    # ---- conv1 (1x1, BN1 scale folded into w1) -> +b1 -> ReLU ----
    h1 = jnp.dot(w1_ref[...], x.astype(jnp.bfloat16),
                 preferred_element_type=jnp.float32)
    h1 = jnp.maximum(h1 + b1, 0.0)                            # (width, L) f32

    # ---- conv2 (3x3, pad=1, groups folded block-diagonal) as ONE im2col matmul ----
    # Per-pixel image coordinates from an in-kernel lane iota (H, W powers of 2;
    # lanes-per-block is a multiple of H*W so block-local index ≡ global mod pix).
    lane = lax.broadcasted_iota(jnp.int32, (width, lanes), 1)
    xx = lane & (spatial_w - 1)
    yy = (lane >> log2_w) & (spatial_h - 1)

    taps = []
    for ky in range(3):
        for kx in range(3):
            dy, dx = ky - 1, kx - 1
            off = dy * spatial_w + dx
            if off == 0:
                taps.append(h1)
                continue
            # Lane rotate (XLU); out-of-image lanes (incl. any wrap across an
            # image boundary) are zeroed, reproducing the conv's zero padding.
            t = pltpu.roll(h1, (-off) % lanes, axis=1)
            ok = ((yy >= -dy) & (yy < spatial_h - dy) &
                  (xx >= -dx) & (xx < spatial_w - dx))
            taps.append(jnp.where(ok, t, 0.0))
    # Mask in f32, cast the finished slab once for the MXU.
    slab = jnp.concatenate(taps, axis=0).astype(jnp.bfloat16)  # (9*width, L)

    h2 = jnp.dot(w2_ref[...], slab, preferred_element_type=jnp.float32)
    h2 = jnp.maximum(h2 + b2, 0.0)                            # (width, L) f32

    # ---- conv3 (1x1, BN3 scale folded) -> +b3 -> residual add -> ReLU ----
    h3 = jnp.dot(w3_ref[...], h2.astype(jnp.bfloat16),
                 preferred_element_type=jnp.float32)
    out_ref[...] = jnp.maximum(h3 + b3 + x, 0.0).astype(out_ref.dtype)


# ------------------------------- wrapper -------------------------------------
def bottleneck_pallas(x_nchw, p, *, lanes_per_block=None):
    n, cin, h, w = x_nchw.shape
    width = p["w1"].shape[0]
    cout = p["w3"].shape[0]
    nb = p["bias"].shape[0]
    # downsample=None => identity residual requires matching channel counts.
    assert cin == cout, "identity residual needs inplanes == planes * expansion"
    assert p["w1"].shape[1] == cin
    assert (h & (h - 1)) == 0 and (w & (w - 1)) == 0, \
        "in-kernel border mask needs power-of-two H, W"

    pix = h * w
    total = n * pix
    # Default: fold the whole batch into one lane-dense block (do NOT split a
    # tiny batch across v7x's two TensorCores).  For big inputs pick
    # lanes_per_block as a multiple of pix and 128 (ideally 256+ on v6e/v7x).
    lpb = lanes_per_block if lanes_per_block is not None else total
    assert total % lpb == 0 and lpb % pix == 0
    if lpb != total:
        assert lpb % 128 == 0

    # NCHW -> lane-dense (Cin, N*H*W): tiny wrapper-side transpose.
    x2d = jnp.transpose(x_nchw.reshape(n, cin, pix), (1, 0, 2)).reshape(cin, total)

    flops = 2 * total * (cin * width + 9 * width * width + width * cout)
    bytes_accessed = (4 * (cin * total + cout * total)
                      + 2 * (p["w1"].size + p["w2"].size + p["w3"].size)
                      + 4 * nb)

    out2d = pl.pallas_call(
        functools.partial(_bottleneck_kernel, h, w),
        out_shape=jax.ShapeDtypeStruct((cout, total), x_nchw.dtype),
        grid=(total // lpb,),
        in_specs=[
            pl.BlockSpec((cin, lpb), lambda g: (0, g)),
            pl.BlockSpec((width, cin), lambda g: (0, 0)),        # resident
            pl.BlockSpec((width, 9 * width), lambda g: (0, 0)),  # resident
            pl.BlockSpec((cout, width), lambda g: (0, 0)),       # resident
            pl.BlockSpec((nb, 1), lambda g: (0, 0)),             # packed biases
        ],
        out_specs=pl.BlockSpec((cout, lpb), lambda g: (0, g)),
        compiler_params=pltpu.CompilerParams(dimension_semantics=("parallel",)),
        cost_estimate=pl.CostEstimate(flops=flops, transcendentals=0,
                                      bytes_accessed=bytes_accessed),
    )(x2d, p["w1"], p["w2"], p["w3"], p["bias"])

    # lane-dense (Cout, N*H*W) -> NCHW (tiny wrapper-side transpose back).
    return jnp.transpose(out2d.reshape(cout, n, pix), (1, 0, 2)).reshape(n, cout, h, w)


# --------------------------- parameter building ------------------------------
def make_params(key, inplanes, planes, groups, base_width):
    expansion = 4
    width = int(planes * (base_width / 64.0)) * groups
    cout = planes * expansion
    cpg = width // groups
    ks = jax.random.split(key, 6)

    # PyTorch-layout conv weights (OIHW), bias=False.
    w1_pt = jax.random.normal(ks[0], (width, inplanes, 1, 1), jnp.float32) * (inplanes ** -0.5)
    w2_pt = jax.random.normal(ks[1], (width, cpg, 3, 3), jnp.float32) * ((9 * cpg) ** -0.5)
    w3_pt = jax.random.normal(ks[2], (cout, width, 1, 1), jnp.float32) * (width ** -0.5)

    def bn_params(k, c):
        k1, k2, k3, k4 = jax.random.split(k, 4)
        gamma = jax.random.uniform(k1, (c,), jnp.float32, 0.5, 1.5)
        beta = 0.1 * jax.random.normal(k2, (c,), jnp.float32)
        mean = 0.1 * jax.random.normal(k3, (c,), jnp.float32)
        var = jax.random.uniform(k4, (c,), jnp.float32, 0.5, 1.5)
        return gamma, beta, mean, var

    bn1 = bn_params(ks[3], width)
    bn2 = bn_params(ks[4], width)
    bn3 = bn_params(ks[5], cout)

    def fuse_bn(bn, eps=1e-5):
        gamma, beta, mean, var = bn
        s = gamma / jnp.sqrt(var + eps)
        return s, beta - mean * s

    s1, b1 = fuse_bn(bn1)
    s2, b2 = fuse_bn(bn2)
    s3, b3 = fuse_bn(bn3)

    # ---- kernel-layout weights: fold BN scale in f32, cast once to bf16 ----
    w1 = (w1_pt[:, :, 0, 0] * s1[:, None]).astype(jnp.bfloat16)          # (width, Cin)
    w3 = (w3_pt[:, :, 0, 0] * s3[:, None]).astype(jnp.bfloat16)          # (Cout, width)

    # grouped 3x3 -> block-diagonal dense -> (width, 9*width) im2col matrix,
    # column index = (ky*3 + kx) * width + cin  (matches the in-kernel tap order).
    w2_np = np.zeros((width, width, 3, 3), np.float32)
    w2_src = np.asarray(w2_pt)
    for g in range(groups):
        sl = slice(g * cpg, (g + 1) * cpg)
        w2_np[sl, sl] = w2_src[sl]
    w2_np = w2_np * np.asarray(s2)[:, None, None, None]                   # fold scale (f32)
    w2 = jnp.asarray(np.transpose(w2_np, (0, 2, 3, 1)).reshape(width, 9 * width),
                     dtype=jnp.bfloat16)

    # Pack the three bias vectors into one (8-row-aligned) f32 input.
    o2 = _round_up(width, 8)
    o3 = o2 + _round_up(width, 8)
    nb = o3 + cout
    bias = np.zeros((nb, 1), np.float32)
    bias[0:width, 0] = np.asarray(b1)
    bias[o2:o2 + width, 0] = np.asarray(b2)
    bias[o3:o3 + cout, 0] = np.asarray(b3)

    pallas_params = dict(w1=w1, w2=w2, w3=w3, bias=jnp.asarray(bias))
    torch_params = dict(w1=w1_pt, w2=w2_pt, w3=w3_pt, bn1=bn1, bn2=bn2, bn3=bn3,
                        groups=groups)
    return pallas_params, torch_params


# ------------------------- pure-JAX reference (NCHW) -------------------------
def reference_forward(x, tp):
    """Eval-mode Bottleneck: BN folded into the conv (exact algebra), convs run
    with bf16 operands + f32 accumulation to mirror the kernel's MXU precision."""
    dn = ('NCHW', 'OIHW', 'NCHW')

    def fold(w_, bn, eps=1e-5):
        gamma, beta, mean, var = bn
        s = gamma / jnp.sqrt(var + eps)
        b = beta - mean * s
        return (w_ * s[:, None, None, None]).astype(jnp.bfloat16), b

    def conv(h, w_, padding, groups=1):
        return lax.conv_general_dilated(
            h.astype(jnp.bfloat16), w_, (1, 1), padding,
            dimension_numbers=dn, feature_group_count=groups,
            preferred_element_type=jnp.float32)

    w1, b1 = fold(tp["w1"], tp["bn1"])
    w2, b2 = fold(tp["w2"], tp["bn2"])
    w3, b3 = fold(tp["w3"], tp["bn3"])

    out = jax.nn.relu(conv(x, w1, 'VALID') + b1[None, :, None, None])
    out = jax.nn.relu(conv(out, w2, [(1, 1), (1, 1)], tp["groups"]) + b2[None, :, None, None])
    out = conv(out, w3, 'VALID') + b3[None, :, None, None]
    return jax.nn.relu(out + x)                              # downsample=None


# --------------------------------- main ---------------------------------------
if __name__ == "__main__":
    inplanes, planes, groups, base_width = 16, 4, 2, 64      # width=8, cout=16
    N, H, W = 4, 8, 8                                        # lanes = 256

    key = jax.random.PRNGKey(0)
    kx, kp = jax.random.split(key)
    params, torch_params = make_params(kp, inplanes, planes, groups, base_width)
    x = jax.random.normal(kx, (N, inplanes, H, W), jnp.float32)

    y = jax.block_until_ready(bottleneck_pallas(x, params))

    y_ref = reference_forward(x, torch_params)
    err = float(jnp.max(jnp.abs(y - y_ref)))
    if not (err < 2e-2):
        raise AssertionError(f"Pallas bottleneck mismatch vs reference, max abs err = {err}")
    print("KERNEL_OK")
</pallas_src>

<mosaic_0001>
module attributes {stable_mosaic.version = 11 : i64} {
  func.func @_bottleneck_kernel(%arg0: i32, %arg1: memref<16x256xf32, #tpu.memory_space<vmem>>, %arg2: memref<8x16xbf16, #tpu.memory_space<vmem>>, %arg3: memref<8x72xbf16, #tpu.memory_space<vmem>>, %arg4: memref<16x8xbf16, #tpu.memory_space<vmem>>, %arg5: memref<32x1xf32, #tpu.memory_space<vmem>>, %arg6: memref<16x256xf32, #tpu.memory_space<vmem>>) attributes {dimension_semantics = [#tpu.dimension_semantics<parallel>], iteration_bounds = array<i64: 1>, scalar_prefetch = 0 : i64, scratch_operands = 0 : i64, tpu.core_type = #tpu.core_type<tc>, window_params = [{transform_indices = @transform_0, window_bounds = array<i64: 16, 256>}, {pipeline_mode = #tpu.pipeline_mode<synchronous>, transform_indices = @transform_1, window_bounds = array<i64: 8, 16>}, {pipeline_mode = #tpu.pipeline_mode<synchronous>, transform_indices = @transform_2, window_bounds = array<i64: 8, 72>}, {pipeline_mode = #tpu.pipeline_mode<synchronous>, transform_indices = @transform_3, window_bounds = array<i64: 16, 8>}, {pipeline_mode = #tpu.pipeline_mode<synchronous>, transform_indices = @transform_4, window_bounds = array<i64: 32, 1>}, {transform_indices = @transform_5, window_bounds = array<i64: 16, 256>}]} {
    %c0 = arith.constant 0 : index
    %c0_0 = arith.constant 0 : index
    %0 = vector.load %arg5[%c0, %c0_0] : memref<32x1xf32, #tpu.memory_space<vmem>>, vector<8x1xf32>
    %c8 = arith.constant 8 : index
    %c0_1 = arith.constant 0 : index
    %1 = vector.load %arg5[%c8, %c0_1] : memref<32x1xf32, #tpu.memory_space<vmem>>, vector<8x1xf32>
    %c16 = arith.constant 16 : index
    %c0_2 = arith.constant 0 : index
    %2 = vector.load %arg5[%c16, %c0_2] : memref<32x1xf32, #tpu.memory_space<vmem>>, vector<16x1xf32>
    %c0_3 = arith.constant 0 : index
    %c0_4 = arith.constant 0 : index
    %3 = vector.load %arg1[%c0_3, %c0_4] : memref<16x256xf32, #tpu.memory_space<vmem>>, vector<16x256xf32>
    %c0_5 = arith.constant 0 : index
    %c0_6 = arith.constant 0 : index
    %4 = vector.load %arg2[%c0_5, %c0_6] : memref<8x16xbf16, #tpu.memory_space<vmem>>, vector<8x16xbf16>
    %5 = arith.truncf %3 : vector<16x256xf32> to vector<16x256xbf16>
    %cst = arith.constant dense<0.000000e+00> : vector<8x256xf32>
    %6 = tpu.matmul %4, %5, %cst {dimension_numbers = #tpu.dot_dimension_numbers<[1], [0], [0], [1], [0, 0, 1, 1], [], []>} : vector<8x16xbf16>, vector<16x256xbf16>, vector<8x256xf32> -> vector<8x256xf32>
    %7 = vector.broadcast %0 : vector<8x1xf32> to vector<8x256xf32>
    %8 = arith.addf %6, %7 : vector<8x256xf32>
    %cst_7 = arith.constant 0.000000e+00 : f32
    %9 = vector.broadcast %cst_7 : f32 to vector<8x256xf32>
    %10 = arith.maximumf %8, %9 : vector<8x256xf32>
    %11 = tpu.iota {dimensions = array<i32: 1>} : vector<8x256xi32>
    %c7_i32 = arith.constant 7 : i32
    %12 = vector.broadcast %c7_i32 : i32 to vector<8x256xi32>
    %13 = arith.andi %11, %12 : vector<8x256xi32>
    %c3_i32 = arith.constant 3 : i32
    %14 = vector.broadcast %c3_i32 : i32 to vector<8x256xi32>
    %15 = arith.shrsi %11, %14 : vector<8x256xi32>
    %c7_i32_8 = arith.constant 7 : i32
    %16 = vector.broadcast %c7_i32_8 : i32 to vector<8x256xi32>
    %17 = arith.andi %15, %16 : vector<8x256xi32>
    %c9_i32 = arith.constant 9 : i32
    %18 = tpu.dynamic_rotate %10 by %c9_i32 dim 1 : vector<8x256xf32>, i32 -> vector<8x256xf32>
    %c1_i32 = arith.constant 1 : i32
    %19 = vector.broadcast %c1_i32 : i32 to vector<8x256xi32>
    %20 = arith.cmpi sge, %17, %19 : vector<8x256xi32>
    %c9_i32_9 = arith.constant 9 : i32
    %21 = vector.broadcast %c9_i32_9 : i32 to vector<8x256xi32>
    %22 = arith.cmpi slt, %17, %21 : vector<8x256xi32>
    %23 = arith.andi %20, %22 : vector<8x256xi1>
    %c1_i32_10 = arith.constant 1 : i32
    %24 = vector.broadcast %c1_i32_10 : i32 to vector<8x256xi32>
    %25 = arith.cmpi sge, %13, %24 : vector<8x256xi32>
    %26 = arith.andi %23, %25 : vector<8x256xi1>
    %c9_i32_11 = arith.constant 9 : i32
    %27 = vector.broadcast %c9_i32_11 : i32 to vector<8x256xi32>
    %28 = arith.cmpi slt, %13, %27 : vector<8x256xi32>
    %29 = arith.andi %26, %28 : vector<8x256xi1>
    %cst_12 = arith.constant 0.000000e+00 : f32
    %30 = vector.broadcast %cst_12 : f32 to vector<8x256xf32>
    %31 = arith.select %29, %18, %30 : vector<8x256xi1>, vector<8x256xf32>
    %c8_i32 = arith.constant 8 : i32
    %32 = tpu.dynamic_rotate %10 by %c8_i32 dim 1 : vector<8x256xf32>, i32 -> vector<8x256xf32>
    %c1_i32_13 = arith.constant 1 : i32
    %33 = vector.broadcast %c1_i32_13 : i32 to vector<8x256xi32>
    %34 = arith.cmpi sge, %17, %33 : vector<8x256xi32>
    %c9_i32_14 = arith.constant 9 : i32
    %35 = vector.broadcast %c9_i32_14 : i32 to vector<8x256xi32>
    %36 = arith.cmpi slt, %17, %35 : vector<8x256xi32>
    %37 = arith.andi %34, %36 : vector<8x256xi1>
    %c0_i32 = arith.constant 0 : i32
    %38 = vector.broadcast %c0_i32 : i32 to vector<8x256xi32>
    %39 = arith.cmpi sge, %13, %38 : vector<8x256xi32>
    %40 = arith.andi %37, %39 : vector<8x256xi1>
    %c8_i32_15 = arith.constant 8 : i32
    %41 = vector.broadcast %c8_i32_15 : i32 to vector<8x256xi32>
    %42 = arith.cmpi slt, %13, %41 : vector<8x256xi32>
    %43 = arith.andi %40, %42 : vector<8x256xi1>
    %cst_16 = arith.constant 0.000000e+00 : f32
    %44 = vector.broadcast %cst_16 : f32 to vector<8x256xf32>
    %45 = arith.select %43, %32, %44 : vector<8x256xi1>, vector<8x256xf32>
    %c7_i32_17 = arith.constant 7 : i32
    %46 = tpu.dynamic_rotate %10 by %c7_i32_17 dim 1 : vector<8x256xf32>, i32 -> vector<8x256xf32>
    %c1_i32_18 = arith.constant 1 : i32
    %47 = vector.broadcast %c1_i32_18 : i32 to vector<8x256xi32>
    %48 = arith.cmpi sge, %17, %47 : vector<8x256xi32>
    %c9_i32_19 = arith.constant 9 : i32
    %49 = vector.broadcast %c9_i32_19 : i32 to vector<8x256xi32>
    %50 = arith.cmpi slt, %17, %49 : vector<8x256xi32>
    %51 = arith.andi %48, %50 : vector<8x256xi1>
    %c-1_i32 = arith.constant -1 : i32
    %52 = vector.broadcast %c-1_i32 : i32 to vector<8x256xi32>
    %53 = arith.cmpi sge, %13, %52 : vector<8x256xi32>
    %54 = arith.andi %51, %53 : vector<8x256xi1>
    %c7_i32_20 = arith.constant 7 : i32
    %55 = vector.broadcast %c7_i32_20 : i32 to vector<8x256xi32>
    %56 = arith.cmpi slt, %13, %55 : vector<8x256xi32>
    %57 = arith.andi %54, %56 : vector<8x256xi1>
    %cst_21 = arith.constant 0.000000e+00 : f32
    %58 = vector.broadcast %cst_21 : f32 to vector<8x256xf32>
    %59 = arith.select %57, %46, %58 : vector<8x256xi1>, vector<8x256xf32>
    %c1_i32_22 = arith.constant 1 : i32
    %60 = tpu.dynamic_rotate %10 by %c1_i32_22 dim 1 : vector<8x256xf32>, i32 -> vector<8x256xf32>
    %c0_i32_23 = arith.constant 0 : i32
    %61 = vector.broadcast %c0_i32_23 : i32 to vector<8x256xi32>
    %62 = arith.cmpi sge, %17, %61 : vector<8x256xi32>
    %c8_i32_24 = arith.constant 8 : i32
    %63 = vector.broadcast %c8_i32_24 : i32 to vector<8x256xi32>
    %64 = arith.cmpi slt, %17, %63 : vector<8x256xi32>
    %65 = arith.andi %62, %64 : vector<8x256xi1>
    %c1_i32_25 = arith.constant 1 : i32
    %66 = vector.broadcast %c1_i32_25 : i32 to vector<8x256xi32>
    %67 = arith.cmpi sge, %13, %66 : vector<8x256xi32>
    %68 = arith.andi %65, %67 : vector<8x256xi1>
    %c9_i32_26 = arith.constant 9 : i32
    %69 = vector.broadcast %c9_i32_26 : i32 to vector<8x256xi32>
    %70 = arith.cmpi slt, %13, %69 : vector<8x256xi32>
    %71 = arith.andi %68, %70 : vector<8x256xi1>
    %cst_27 = arith.constant 0.000000e+00 : f32
    %72 = vector.broadcast %cst_27 : f32 to vector<8x256xf32>
    %73 = arith.select %71, %60, %72 : vector<8x256xi1>, vector<8x256xf32>
    %c255_i32 = arith.constant 255 : i32
    %74 = tpu.dynamic_rotate %10 by %c255_i32 dim 1 : vector<8x256xf32>, i32 -> vector<8x256xf32>
    %c0_i32_28 = arith.constant 0 : i32
    %75 = vector.broadcast %c0_i32_28 : i32 to vector<8x256xi32>
    %76 = arith.cmpi sge, %17, %75 : vector<8x256xi32>
    %c8_i32_29 = arith.constant 8 : i32
    %77 = vector.broadcast %c8_i32_29 : i32 to vector<8x256xi32>
    %78 = arith.cmpi slt, %17, %77 : vector<8x256xi32>
    %79 = arith.andi %76, %78 : vector<8x256xi1>
    %c-1_i32_30 = arith.constant -1 : i32
    %80 = vector.broadcast %c-1_i32_30 : i32 to vector<8x256xi32>
    %81 = arith.cmpi sge, %13, %80 : vector<8x256xi32>
    %82 = arith.andi %79, %81 : vector<8x256xi1>
    %c7_i32_31 = arith.constant 7 : i32
    %83 = vector.broadcast %c7_i32_31 : i32 to vector<8x256xi32>
    %84 = arith.cmpi slt, %13, %83 : vector<8x256xi32>
    %85 = arith.andi %82, %84 : vector<8x256xi1>
    %cst_32 = arith.constant 0.000000e+00 : f32
    %86 = vector.broadcast %cst_32 : f32 to vector<8x256xf32>
    %87 = arith.select %85, %74, %86 : vector<8x256xi1>, vector<8x256xf32>
    %c249_i32 = arith.constant 249 : i32
    %88 = tpu.dynamic_rotate %10 by %c249_i32 dim 1 : vector<8x256xf32>, i32 -> vector<8x256xf32>
    %c-1_i32_33 = arith.constant -1 : i32
    %89 = vector.broadcast %c-1_i32_33 : i32 to vector<8x256xi32>
    %90 = arith.cmpi sge, %17, %89 : vector<8x256xi32>
    %c7_i32_34 = arith.constant 7 : i32
    %91 = vector.broadcast %c7_i32_34 : i32 to vector<8x256xi32>
    %92 = arith.cmpi slt, %17, %91 : vector<8x256xi32>
    %93 = arith.andi %90, %92 : vector<8x256xi1>
    %c1_i32_35 = arith.constant 1 : i32
    %94 = vector.broadcast %c1_i32_35 : i32 to vector<8x256xi32>
    %95 = arith.cmpi sge, %13, %94 : vector<8x256xi32>
    %96 = arith.andi %93, %95 : vector<8x256xi1>
    %c9_i32_36 = arith.constant 9 : i32
    %97 = vector.broadcast %c9_i32_36 : i32 to vector<8x256xi32>
    %98 = arith.cmpi slt, %13, %97 : vector<8x256xi32>
    %99 = arith.andi %96, %98 : vector<8x256xi1>
    %cst_37 = arith.constant 0.000000e+00 : f32
    %100 = vector.broadcast %cst_37 : f32 to vector<8x256xf32>
    %101 = arith.select %99, %88, %100 : vector<8x256xi1>, vector<8x256xf32>
    %c248_i32 = arith.constant 248 : i32
    %102 = tpu.dynamic_rotate %10 by %c248_i32 dim 1 : vector<8x256xf32>, i32 -> vector<8x256xf32>
    %c-1_i32_38 = arith.constant -1 : i32
    %103 = vector.broadcast %c-1_i32_38 : i32 to vector<8x256xi32>
    %104 = arith.cmpi sge, %17, %103 : vector<8x256xi32>
    %c7_i32_39 = arith.constant 7 : i32
    %105 = vector.broadcast %c7_i32_39 : i32 to vector<8x256xi32>
    %106 = arith.cmpi slt, %17, %105 : vector<8x256xi32>
    %107 = arith.andi %104, %106 : vector<8x256xi1>
    %c0_i32_40 = arith.constant 0 : i32
    %108 = vector.broadcast %c0_i32_40 : i32 to vector<8x256xi32>
    %109 = arith.cmpi sge, %13, %108 : vector<8x256xi32>
    %110 = arith.andi %107, %109 : vector<8x256xi1>
    %c8_i32_41 = arith.constant 8 : i32
    %111 = vector.broadcast %c8_i32_41 : i32 to vector<8x256xi32>
    %112 = arith.cmpi slt, %13, %111 : vector<8x256xi32>
    %113 = arith.andi %110, %112 : vector<8x256xi1>
    %cst_42 = arith.constant 0.000000e+00 : f32
    %114 = vector.broadcast %cst_42 : f32 to vector<8x256xf32>
    %115 = arith.select %113, %102, %114 : vector<8x256xi1>, vector<8x256xf32>
    %c247_i32 = arith.constant 247 : i32
    %116 = tpu.dynamic_rotate %10 by %c247_i32 dim 1 : vector<8x256xf32>, i32 -> vector<8x256xf32>
    %c-1_i32_43 = arith.constant -1 : i32
    %117 = vector.broadcast %c-1_i32_43 : i32 to vector<8x256xi32>
    %118 = arith.cmpi sge, %17, %117 : vector<8x256xi32>
    %c7_i32_44 = arith.constant 7 : i32
    %119 = vector.broadcast %c7_i32_44 : i32 to vector<8x256xi32>
    %120 = arith.cmpi slt, %17, %119 : vector<8x256xi32>
    %121 = arith.andi %118, %120 : vector<8x256xi1>
    %c-1_i32_45 = arith.constant -1 : i32
    %122 = vector.broadcast %c-1_i32_45 : i32 to vector<8x256xi32>
    %123 = arith.cmpi sge, %13, %122 : vector<8x256xi32>
    %124 = arith.andi %121, %123 : vector<8x256xi1>
    %c7_i32_46 = arith.constant 7 : i32
    %125 = vector.broadcast %c7_i32_46 : i32 to vector<8x256xi32>
    %126 = arith.cmpi slt, %13, %125 : vector<8x256xi32>
    %127 = arith.andi %124, %126 : vector<8x256xi1>
    %cst_47 = arith.constant 0.000000e+00 : f32
    %128 = vector.broadcast %cst_47 : f32 to vector<8x256xf32>
    %129 = arith.select %127, %116, %128 : vector<8x256xi1>, vector<8x256xf32>
    %130 = tpu.concatenate %31, %45, %59, %73, %10, %87, %101, %115, %129 in 0 : vector<8x256xf32>, vector<8x256xf32>, vector<8x256xf32>, vector<8x256xf32>, vector<8x256xf32>, vector<8x256xf32>, vector<8x256xf32>, vector<8x256xf32>, vector<8x256xf32> -> vector<72x256xf32>
    %131 = arith.truncf %130 : vector<72x256xf32> to vector<72x256xbf16>
    %c0_48 = arith.constant 0 : index
    %c0_49 = arith.constant 0 : index
    %132 = vector.load %arg3[%c0_48, %c0_49] : memref<8x72xbf16, #tpu.memory_space<vmem>>, vector<8x72xbf16>
    %cst_50 = arith.constant dense<0.000000e+00> : vector<8x256xf32>
    %133 = tpu.matmul %132, %131, %cst_50 {dimension_numbers = #tpu.dot_dimension_numbers<[1], [0], [0], [1], [0, 0, 1, 1], [], []>} : vector<8x72xbf16>, vector<72x256xbf16>, vector<8x256xf32> -> vector<8x256xf32>
    %134 = vector.broadcast %1 : vector<8x1xf32> to vector<8x256xf32>
    %135 = arith.addf %133, %134 : vector<8x256xf32>
    %cst_51 = arith.constant 0.000000e+00 : f32
    %136 = vector.broadcast %cst_51 : f32 to vector<8x256xf32>
    %137 = arith.maximumf %135, %136 : vector<8x256xf32>
    %c0_52 = arith.constant 0 : index
    %c0_53 = arith.constant 0 : index
    %138 = vector.load %arg4[%c0_52, %c0_53] : memref<16x8xbf16, #tpu.memory_space<vmem>>, vector<16x8xbf16>
    %139 = arith.truncf %137 : vector<8x256xf32> to vector<8x256xbf16>
    %cst_54 = arith.constant dense<0.000000e+00> : vector<16x256xf32>
    %140 = tpu.matmul %138, %139, %cst_54 {dimension_numbers = #tpu.dot_dimension_numbers<[1], [0], [0], [1], [0, 0, 1, 1], [], []>} : vector<16x8xbf16>, vector<8x256xbf16>, vector<16x256xf32> -> vector<16x256xf32>
    %141 = vector.broadcast %2 : vector<16x1xf32> to vector<16x256xf32>
    %142 = arith.addf %140, %141 : vector<16x256xf32>
    %143 = arith.addf %142, %3 : vector<16x256xf32>
    %cst_55 = arith.constant 0.000000e+00 : f32
    %144 = vector.broadcast %cst_55 : f32 to vector<16x256xf32>
    %145 = arith.maximumf %143, %144 : vector<16x256xf32>
    %c0_56 = arith.constant 0 : index
    %c0_57 = arith.constant 0 : index
    %146 = vector.load %arg6[%c0_56, %c0_57] : memref<16x256xf32, #tpu.memory_space<vmem>>, vector<16x256xf32>
    tpu.vector_store %arg6[%c0_56, %c0_57], %145 {strides = array<i32>} : memref<16x256xf32, #tpu.memory_space<vmem>>, vector<16x256xf32>,
    return
  }
  func.func @transform_0(%arg0: i32) -> (i32, i32) {
    %c0_i32 = arith.constant 0 : i32
    %c0_i32_0 = arith.constant 0 : i32
    return %c0_i32, %arg0 : i32, i32
  }
  func.func @transform_1(%arg0: i32) -> (i32, i32) {
    %c0_i32 = arith.constant 0 : i32
    %c0_i32_0 = arith.constant 0 : i32
    %c0_i32_1 = arith.constant 0 : i32
    return %c0_i32, %c0_i32_0 : i32, i32
  }
  func.func @transform_2(%arg0: i32) -> (i32, i32) {
    %c0_i32 = arith.constant 0 : i32
    %c0_i32_0 = arith.constant 0 : i32
    %c0_i32_1 = arith.constant 0 : i32
    return %c0_i32, %c0_i32_0 : i32, i32
  }
  func.func @transform_3(%arg0: i32) -> (i32, i32) {
    %c0_i32 = arith.constant 0 : i32
    %c0_i32_0 = arith.constant 0 : i32
    %c0_i32_1 = arith.constant 0 : i32
    return %c0_i32, %c0_i32_0 : i32, i32
  }
  func.func @transform_4(%arg0: i32) -> (i32, i32) {
    %c0_i32 = arith.constant 0 : i32
    %c0_i32_0 = arith.constant 0 : i32
    %c0_i32_1 = arith.constant 0 : i32
    return %c0_i32, %c0_i32_0 : i32, i32
  }
  func.func @transform_5(%arg0: i32) -> (i32, i32) {
    %c0_i32 = arith.constant 0 : i32
    %c0_i32_0 = arith.constant 0 : i32
    return %c0_i32, %arg0 : i32, i32
  }
}

</mosaic_0001>

<llo_original>
// kernel: tpu_custom_call.1
$region0: #{tpu_custom_call.1}
  #allocation0 [shape = 'u32[]', space=smem, size = 0x4, offset = 0x4, fixed_abs, tag = 'smem constant byte address 0x4 - core index']
  #allocation1 [shape = 'u32[144,128]{1,0:T(1,128)}', space=vmem, size = 0x12000, scoped, tag = 'internal scratch']
  %s0 = inlined_call_operand.vmem [shape: f32[16,256], index: 0, kind: input, shape index: {}]
  %s1 = inlined_call_operand.vmem [shape: bf16[8,16], index: 1, kind: input, shape index: {}]
  %s2 = inlined_call_operand.vmem [shape: bf16[8,72], index: 2, kind: input, shape index: {}]
  %s3 = inlined_call_operand.vmem [shape: bf16[16,8], index: 3, kind: input, shape index: {}]
  %s4 = inlined_call_operand.vmem [shape: f32[32,1], index: 4, kind: input, shape index: {}]
  %s5 = inlined_call_operand.hbm [shape: f32[16,256], index: 5, kind: output, shape index: {}]
  %s6 = sld [smem:[#allocation0]]
  $region30: #{tpu_custom_call.1} parent=0
    _
  %s8 = ssub.s32 1, %s6
  %s9 = scalar_select 0, %s8, %s6
  $region1: #{tpu_custom_call.1} parent=0
    #allocation2 [shape = 'u8[16384]{0}', space=vmem, size = 0x4000, scoped, tag = 'output window, operand 0, single buffered']
    #allocation3 [shape = 's32[1]{0}', space=sflag, size = 0x4, scoped, tag = 'scoped memory for tpu_custom_call.1']
    %10 = vsyncpa [#allocation3], 0
    // Predicated region
    $region2: #{tpu_custom_call.1} parent=1 // pred_check
      _
    $region3: #{tpu_custom_call.1} parent=1 // pred_check_branch
      %12 = sbr.rel (0) target = $region5
    $region4: #{tpu_custom_call.1} parent=1 // pred_region
      _
    $region5: #{tpu_custom_call.1} parent=1 // pred_fallthru
      _
    // Predicated region
    $region6: #{tpu_custom_call.1} parent=1 // pred_check
      _
    $region7: #{tpu_custom_call.1} parent=1 // pred_check_branch
      %14 = sbr.rel (0) target = $region9
    $region8: #{tpu_custom_call.1} parent=1 // pred_region
      _
    $region9: #{tpu_custom_call.1} parent=1 // pred_fallthru
      _
    // Predicated region
    $region10: #{tpu_custom_call.1} parent=1 // pred_check
      _
    $region11: #{tpu_custom_call.1} parent=1 // pred_check_branch
      %16 = sbr.rel (0) target = $region13
    $region12: #{tpu_custom_call.1} parent=1 // pred_region
      _
    $region13: #{tpu_custom_call.1} parent=1 // pred_fallthru
      _
    // Predicated region
    $region14: #{tpu_custom_call.1} parent=1 // pred_check
      _
    $region15: #{tpu_custom_call.1} parent=1 // pred_check_branch
      %18 = sbr.rel (0) target = $region17
    $region16: #{tpu_custom_call.1} parent=1 // pred_region
      _
    $region17: #{tpu_custom_call.1} parent=1 // pred_fallthru
      _
    // Predicated region
    $region18: #{tpu_custom_call.1} parent=1 // pred_check
      _
    $region19: #{tpu_custom_call.1} parent=1 // pred_check_branch
      %20 = sbr.rel (0) target = $region21
    $region20: #{tpu_custom_call.1} parent=1 // pred_region
      _
    $region21: #{tpu_custom_call.1} parent=1 // pred_fallthru
      _
    %v22 = vld [vmem:[%s4] sm:$0xff]
    %v23 = vld [vmem:[%s4 + $0x8] sm:$0xff]
    %v24 = vld [vmem:[%s4 + $0x10] sm:$0xff]
    %v25 = vld [vmem:[%s4 + $0x18] sm:$0xff]
    %v26 = vld [vmem:[%s0] sm:$0xff]
    %v27 = vld [vmem:[%s0 + $0x8] sm:$0xff]
    %v28 = vld [vmem:[%s0 + $0x10] sm:$0xff]
    %v29 = vld [vmem:[%s0 + $0x18] sm:$0xff]
    %v30 = vld [vmem:[%s1] sm:$0xf]
    %v31 = vpack.c.bf16 %v28, %v26
    %v32 = vpack.c.bf16 %v29, %v27
    %34 = vset.pattern.permute.xlu0 0
    %35 = vperm.xlu0 %34, %v22
    %v36 = vpop.permute.xlu0 %35
    %vm38 = vcmask 130048
    %v40 = vsel %vm38, %v30, 0
    %42 = vmatprep.subr.bf16.mxu0 0
    %43 = vmatpush1.bf16.msra.mxu0 0
    %44 = vmatprep.subr.bf16.mxu0 0
    %45 = vmatpush1.bf16.msra.mxu0 0
    %46 = vmatprep.subr.bf16.mxu0 0
    %47 = vmatpush1.bf16.msra.mxu0 0
    %48 = vmatprep.subr.bf16.mxu0 0
    %49 = vmatpush1.bf16.msra.mxu0 0
    %50 = vmatprep.subr.bf16.mxu0 0
    %51 = vmatpush1.bf16.msra.mxu0 0
    %52 = vmatprep.subr.bf16.mxu0 0
    %53 = vmatpush1.bf16.msra.mxu0 0
    %54 = vmatprep.subr.bf16.mxu0 0
    %55 = vmatpush1.bf16.msra.mxu0 0
    %56 = vmatprep.subr.bf16.mxu0 %v32
    %57 = vmatpush1.bf16.msra.mxu0 %v31
    %58 = vmatprep.subr.bf16.mxu0 0
    %59 = vmatpush2.bf16.msra.mxu0 0
    %60 = vmatprep.subr.bf16.mxu0 0
    %61 = vmatpush2.bf16.msra.mxu0 0
    %62 = vmatprep.subr.bf16.mxu0 0
    %63 = vmatpush2.bf16.msra.mxu0 0
    %64 = vmatprep.subr.bf16.mxu0 0
    %65 = vmatpush2.bf16.msra.mxu0 0
    %66 = vmatprep.subr.bf16.mxu0 0
    %67 = vmatpush2.bf16.msra.mxu0 0
    %68 = vmatprep.subr.bf16.mxu0 0
    %69 = vmatpush2.bf16.msra.mxu0 0
    %70 = vmatprep.subr.bf16.mxu0 0
    %71 = vmatpush2.bf16.msra.mxu0 0
    %72 = vmatprep.subr.bf16.mxu0 0
    %73 = vmatpush2.bf16.msra.mxu0 0
    %74 = vmatprep.mubr.bf16.mxu0 0
    %75 = vmatmul.mubr.bf16.gmra.mxu0 %v40
    %v76 = vpop.f32.mrf.mxu0
    %v77 = vadd.f32 %v36, %v76
    %v78 = vpop.f32.mrf.mxu0
    %v79 = vadd.f32 %v36, %v78
    %v80 = vpop.f32.mrf.mxu0
    %v81 = vpop.f32.mrf.mxu0
    %82 = vdwg.mxu0
    %v83 = vmax.f32 %v77, 0.0
    %v84 = vmax.f32 %v79, 0.0
    %v85 = vlaneseq
    %v86 = vand.u32 %v85, 127
    %v87 = vadd.s32 %v86, 128
    %v88 = vand.u32 %v86, 7
    %v89 = vand.u32 %v87, 7
    %v90 = vshra.s32 %v86, 3
    %v91 = vshra.s32 %v87, 3
    %v92 = vand.u32 %v90, 7
    %v93 = vand.u32 %v91, 7
    %94 = vrot.lane.b32.xlu0 %v83, 9
    %v95 = vpop.permute.xlu0 %94
    %96 = vrot.lane.b32.xlu0 %v84, 9
    %v97 = vpop.permute.xlu0 %96
    %vm98 = vcmp.lt.s32.totalorder %v86, 9
    %v99 = vsel %vm98, %v95, %v97
    %v100 = vsel %vm98, %v97, %v95
    %vm101 = vcmp.ge.s32.totalorder %v92, 1
    %vm102 = vcmp.ge.s32.totalorder %v93, 1
    %vm103 = vcmp.lt.s32.totalorder %v92, 9
    %vm104 = vcmp.lt.s32.totalorder %v93, 9
    %vm105 = vmand %vm101, %vm103
    %vm106 = vmand %vm102, %vm104
    %vm107 = vcmp.ge.s32.totalorder %v88, 1
    %vm108 = vcmp.ge.s32.totalorder %v89, 1
    %vm109 = vmand %vm105, %vm107
    %vm110 = vmand %vm106, %vm108
    %vm111 = vcmp.lt.s32.totalorder %v88, 9
    %vm112 = vcmp.lt.s32.totalorder %v89, 9
    %vm113 = vmand %vm109, %vm111
    %vm114 = vmand %vm110, %vm112
    %v115 = vsel %vm113, %v100, 0.0
    %v116 = vsel %vm114, %v99, 0.0
    %117 = vrot.lane.b32.xlu0 %v83, 8
    %v118 = vpop.permute.xlu0 %117
    %119 = vrot.lane.b32.xlu0 %v84, 8
    %v120 = vpop.permute.xlu0 %119
    %vm121 = vcmp.lt.s32.totalorder %v86, 8
    %v122 = vsel %vm121, %v118, %v120
    %v123 = vsel %vm121, %v120, %v118
    %vm124 = vcmp.ge.s32.totalorder %v88, 0
    %vm125 = vcmp.ge.s32.totalorder %v89, 0
    %vm126 = vmand %vm105, %vm124
    %vm127 = vmand %vm106, %vm125
    %vm128 = vcmp.lt.s32.totalorder %v88, 8
    %vm129 = vcmp.lt.s32.totalorder %v89, 8
    %vm130 = vmand %vm126, %vm128
    %vm131 = vmand %vm127, %vm129
    %v132 = vsel %vm130, %v123, 0.0
    %v133 = vsel %vm131, %v122, 0.0
    %134 = vrot.lane.b32.xlu0 %v83, 7
    %v135 = vpop.permute.xlu0 %134
    %136 = vrot.lane.b32.xlu0 %v84, 7
    %v137 = vpop.permute.xlu0 %136
    %vm138 = vcmp.lt.s32.totalorder %v86, 7
    %v139 = vsel %vm138, %v135, %v137
    %v140 = vsel %vm138, %v137, %v135
    %vm141 = vcmp.ge.s32.totalorder %v88, 4294967295
    %vm142 = vcmp.ge.s32.totalorder %v89, 4294967295
    %vm143 = vmand %vm105, %vm141
    %vm144 = vmand %vm106, %vm142
    %vm145 = vcmp.lt.s32.totalorder %v88, 7
    %vm146 = vcmp.lt.s32.totalorder %v89, 7
    %vm147 = vmand %vm143, %vm145
    %vm148 = vmand %vm144, %vm146
    %v149 = vsel %vm147, %v140, 0.0
    %v150 = vsel %vm148, %v139, 0.0
    %151 = vrot.lane.b32.xlu0 %v83, 1
    %v152 = vpop.permute.xlu0 %151
    %153 = vrot.lane.b32.xlu0 %v84, 1
    %v154 = vpop.permute.xlu0 %153
    %vm155 = vcmp.lt.s32.totalorder %v86, 1
    %v156 = vsel %vm155, %v152, %v154
    %v157 = vsel %vm155, %v154, %v152
    %vm158 = vcmp.ge.s32.totalorder %v92, 0
    %vm159 = vcmp.ge.s32.totalorder %v93, 0
    %vm160 = vcmp.lt.s32.totalorder %v92, 8
    %vm161 = vcmp.lt.s32.totalorder %v93, 8
    %vm162 = vmand %vm158, %vm160
    %vm163 = vmand %vm159, %vm161
    %vm164 = vmand %vm162, %vm107
    %vm165 = vmand %vm163, %vm108
    %vm166 = vmand %vm164, %vm111
    %vm167 = vmand %vm165, %vm112
    %v168 = vsel %vm166, %v157, 0.0
    %v169 = vsel %vm167, %v156, 0.0
    %170 = vrot.lane.b32.xlu0 %v83, 127
    %v171 = vpop.permute.xlu0 %170
    %172 = vrot.lane.b32.xlu0 %v84, 127
    %v173 = vpop.permute.xlu0 %172
    %vm174 = vcmp.lt.s32.totalorder %v86, 127
    %v175 = vsel %vm174, %v171, %v173
    %v176 = vsel %vm174, %v173, %v171
    %vm177 = vmand %vm162, %vm141
    %vm178 = vmand %vm163, %vm142
    %vm179 = vmand %vm177, %vm145
    %vm180 = vmand %vm178, %vm146
    %v181 = vsel %vm179, %v175, 0.0
    %v182 = vsel %vm180, %v176, 0.0
    %183 = vrot.lane.b32.xlu0 %v83, 121
    %v184 = vpop.permute.xlu0 %183
    %185 = vrot.lane.b32.xlu0 %v84, 121
    %v186 = vpop.permute.xlu0 %185
    %vm187 = vcmp.lt.s32.totalorder %v86, 121
    %v188 = vsel %vm187, %v184, %v186
    %v189 = vsel %vm187, %v186, %v184
    %vm190 = vcmp.ge.s32.totalorder %v92, 4294967295
    %vm191 = vcmp.ge.s32.totalorder %v93, 4294967295
    %vm192 = vcmp.lt.s32.totalorder %v92, 7
    %vm193 = vcmp.lt.s32.totalorder %v93, 7
    %vm194 = vmand %vm190, %vm192
    %vm195 = vmand %vm191, %vm193
    %vm196 = vmand %vm194, %vm107
    %vm197 = vmand %vm195, %vm108
    %vm198 = vmand %vm196, %vm111
    %vm199 = vmand %vm197, %vm112
    %v200 = vsel %vm198, %v188, 0.0
    %v201 = vsel %vm199, %v189, 0.0
    %202 = vrot.lane.b32.xlu0 %v83, 120
    %v203 = vpop.permute.xlu0 %202
    %204 = vrot.lane.b32.xlu0 %v84, 120
    %v205 = vpop.permute.xlu0 %204
    %vm206 = vcmp.lt.s32.totalorder %v86, 120
    %v207 = vsel %vm206, %v203, %v205
    %v208 = vsel %vm206, %v205, %v203
    %vm209 = vmand %vm194, %vm124
    %vm210 = vmand %vm195, %vm125
    %vm211 = vmand %vm209, %vm128
    %vm212 = vmand %vm210, %vm129
    %v213 = vsel %vm211, %v207, 0.0
    %v214 = vsel %vm212, %v208, 0.0
    %215 = vrot.lane.b32.xlu0 %v83, 119
    %v216 = vpop.permute.xlu0 %215
    %217 = vrot.lane.b32.xlu0 %v84, 119
    %v218 = vpop.permute.xlu0 %217
    %vm219 = vcmp.lt.s32.totalorder %v86, 119
    %v220 = vsel %vm219, %v216, %v218
    %v221 = vsel %vm219, %v218, %v216
    %vm222 = vmand %vm194, %vm141
    %vm223 = vmand %vm195, %vm142
    %vm224 = vmand %vm222, %vm145
    %vm225 = vmand %vm223, %vm146
    %v226 = vsel %vm224, %v220, 0.0
    %v227 = vsel %vm225, %v221, 0.0
    %v228 = vpack.c.bf16 %v132, %v115
    %v229 = vpack.c.bf16 %v133, %v116
    %v230 = vpack.c.bf16 %v168, %v149
    %v231 = vpack.c.bf16 %v169, %v150
    %v232 = vpack.c.bf16 %v181, %v83
    %v233 = vpack.c.bf16 %v182, %v84
    %v234 = vpack.c.bf16 %v213, %v200
    %v235 = vpack.c.bf16 %v214, %v201
    %v236 = vpack.c.bf16 %v226, %v226
    %v237 = vpack.c.bf16 %v227, %v227
    %v238 = vld [vmem:[%s2] sm:$0xf]
    %240 = vset.pattern.permute.xlu0 0
    %241 = vperm.xlu0 %240, %v23
    %v242 = vpop.permute.xlu0 %241
    %vm244 = vcmask 588800
    %v246 = vsel %vm244, %v238, 0
    %vm248 = vcmask 1043456
    %v250 = vsel %vm248, %v236, 0
    %v253 = vsel %vm248, %v237, 0
    %255 = vmatprep.subr.bf16.mxu0 0
    %256 = vmatpush1.bf16.msra.mxu0 0
    %257 = vmatprep.subr.bf16.mxu0 0
    %258 = vmatpush1.bf16.msra.mxu0 0
    %259 = vmatprep.subr.bf16.mxu0 0
    %260 = vmatpush1.bf16.msra.mxu0 0
    %261 = vmatprep.subr.bf16.mxu0 %v253
    %262 = vmatpush1.bf16.msra.mxu0 %v250
    %263 = vmatprep.subr.bf16.mxu0 %v235
    %264 = vmatpush1.bf16.msra.mxu0 %v234
    %265 = vmatprep.subr.bf16.mxu0 %v233
    %266 = vmatpush1.bf16.msra.mxu0 %v232
    %267 = vmatprep.subr.bf16.mxu0 %v231
    %268 = vmatpush1.bf16.msra.mxu0 %v230
    %269 = vmatprep.subr.bf16.mxu0 %v229
    %270 = vmatpush1.bf16.msra.mxu0 %v228
    %271 = vmatprep.subr.bf16.mxu0 0
    %272 = vmatpush2.bf16.msra.mxu0 0
    %273 = vmatprep.subr.bf16.mxu0 0
    %274 = vmatpush2.bf16.msra.mxu0 0
    %275 = vmatprep.subr.bf16.mxu0 0
    %276 = vmatpush2.bf16.msra.mxu0 0
    %277 = vmatprep.subr.bf16.mxu0 0
    %278 = vmatpush2.bf16.msra.mxu0 0
    %279 = vmatprep.subr.bf16.mxu0 0
    %280 = vmatpush2.bf16.msra.mxu0 0
    %281 = vmatprep.subr.bf16.mxu0 0
    %282 = vmatpush2.bf16.msra.mxu0 0
    %283 = vmatprep.subr.bf16.mxu0 0
    %284 = vmatpush2.bf16.msra.mxu0 0
    %285 = vmatprep.subr.bf16.mxu0 0
    %286 = vmatpush2.bf16.msra.mxu0 0
    %287 = vmatprep.mubr.bf16.mxu0 0
    %288 = vmatmul.mubr.bf16.gmra.mxu0 %v246
    %v289 = vpop.f32.mrf.mxu0
    %v290 = vadd.f32 %v242, %v289
    %v291 = vpop.f32.mrf.mxu0
    %v292 = vadd.f32 %v242, %v291
    %v293 = vpop.f32.mrf.mxu0
    %v294 = vpop.f32.mrf.mxu0
    %295 = vdwg.mxu0
    %v296 = vmax.f32 %v290, 0.0
    %v297 = vmax.f32 %v292, 0.0
    %v298 = vld [vmem:[%s3] sm:$0xf]
    %v299 = vld [vmem:[%s3 + $0x4] sm:$0xf]
    %v300 = vpack.c.bf16 %v296, %v296
    %v301 = vpack.c.bf16 %v297, %v297
    %303 = vset.pattern.permute.xlu0 0
    %304 = vperm.xlu0 %303, %v24
    %v305 = vpop.permute.xlu0 %304
    %308 = vset.pattern.permute.xlu0 0
    %309 = vperm.xlu0 %308, %v25
    %v310 = vpop.permute.xlu0 %309
    %v314 = vunpack.c.l.b16 %v298
    %v315 = vunpack.c.l.b16 %v299
    %v316 = vpack.c.b16 %v315, %v314
    %vm317 = vcmask 64512
    %v319 = vsel %vm317, %v316, 0
    %v322 = vsel %vm248, %v300, 0
    %v325 = vsel %vm248, %v301, 0
    %327 = vmatprep.subr.bf16.mxu0 0
    %328 = vmatpush1.bf16.msra.mxu0 0
    %329 = vmatprep.subr.bf16.mxu0 0
    %330 = vmatpush1.bf16.msra.mxu0 0
    %331 = vmatprep.subr.bf16.mxu0 0
    %332 = vmatpush1.bf16.msra.mxu0 0
    %333 = vmatprep.subr.bf16.mxu0 0
    %334 = vmatpush1.bf16.msra.mxu0 0
    %335 = vmatprep.subr.bf16.mxu0 0
    %336 = vmatpush1.bf16.msra.mxu0 0
    %337 = vmatprep.subr.bf16.mxu0 0
    %338 = vmatpush1.bf16.msra.mxu0 0
    %339 = vmatprep.subr.bf16.mxu0 0
    %340 = vmatpush1.bf16.msra.mxu0 0
    %341 = vmatprep.subr.bf16.mxu0 %v325
    %342 = vmatpush1.bf16.msra.mxu0 %v322
    %343 = vmatprep.subr.bf16.mxu0 0
    %344 = vmatpush2.bf16.msra.mxu0 0
    %345 = vmatprep.subr.bf16.mxu0 0
    %346 = vmatpush2.bf16.msra.mxu0 0
    %347 = vmatprep.subr.bf16.mxu0 0
    %348 = vmatpush2.bf16.msra.mxu0 0
    %349 = vmatprep.subr.bf16.mxu0 0
    %350 = vmatpush2.bf16.msra.mxu0 0
    %351 = vmatprep.subr.bf16.mxu0 0
    %352 = vmatpush2.bf16.msra.mxu0 0
    %353 = vmatprep.subr.bf16.mxu0 0
    %354 = vmatpush2.bf16.msra.mxu0 0
    %355 = vmatprep.subr.bf16.mxu0 0
    %356 = vmatpush2.bf16.msra.mxu0 0
    %357 = vmatprep.subr.bf16.mxu0 0
    %358 = vmatpush2.bf16.msra.mxu0 0
    %359 = vmatprep.mubr.bf16.mxu0 0
    %360 = vmatmul.mubr.bf16.gmra.mxu0 %v319
    %v361 = vpop.f32.mrf.mxu0
    %v362 = vadd.f32 %v305, %v361
    %v363 = vpop.f32.mrf.mxu0
    %v364 = vadd.f32 %v305, %v363
    %v365 = vpop.f32.mrf.mxu0
    %v366 = vadd.f32 %v310, %v365
    %v367 = vpop.f32.mrf.mxu0
    %v368 = vadd.f32 %v310, %v367
    %369 = vdwg.mxu0
    %v370 = vadd.f32 %v362, %v26
    %v371 = vadd.f32 %v364, %v27
    %v372 = vadd.f32 %v366, %v28
    %v373 = vadd.f32 %v368, %v29
    %v374 = vmax.f32 %v370, 0.0
    %v375 = vmax.f32 %v371, 0.0
    %v376 = vmax.f32 %v372, 0.0
    %v377 = vmax.f32 %v373, 0.0
    %378 = vst [vmem:[#allocation2] sm:$0xff] %v374
    %379 = vst [vmem:[#allocation2 + $0x8] sm:$0xff] %v375
    %380 = vst [vmem:[#allocation2 + $0x10] sm:$0xff] %v376
    %381 = vst [vmem:[#allocation2 + $0x18] sm:$0xff] %v377
    // Predicated region
    $region22: #{tpu_custom_call.1} parent=1 // pred_check
      _
    $region23: #{tpu_custom_call.1} parent=1 // pred_check_branch
      %383 = sbr.rel (0) target = $region25
    $region24: #{tpu_custom_call.1} parent=1 // pred_region
      %s385 = ssub.s32 512, 512
      %386 = vsyncadd [#allocation3], %s385
      %s387 = sshll.u32 [#allocation2], 4
      %s388 = int_to_ptr.vmem [resolvable:$true] %s387
      %393 = dma.vmem_to_hbm [thread:$0]  %s388, 512, %s5, [#allocation3], 256, 256, 16
    $region25: #{tpu_custom_call.1} parent=1 // pred_fallthru
      _
    // Predicated region
    $region26: #{tpu_custom_call.1} parent=1 // pred_check
      _
    $region27: #{tpu_custom_call.1} parent=1 // pred_check_branch
      %395 = sbr.rel (0) target = $region29
    $region28: #{tpu_custom_call.1} parent=1 // pred_region
      %396 = dma.done [#allocation3], 512
    $region29: #{tpu_custom_call.1} parent=1 // pred_fallthru
      _
    %397 = vsyncpa [#allocation3], 1

</llo_original>
